<compile_context>
chip_gen: v7x
topology: tpu7x:2x2x1
jax: 0.10.0
libtpu: 0.0.40
codegen_flags: <defaults>
</compile_context>

<pallas_src>
import numpy as np
import jax
import jax.numpy as jnp
from jax.experimental import pallas as pl
from jax.experimental.pallas import tpu as pltpu

# ---------------- synthetic config (small shapes) ----------------
IN_CHANNELS = 4          # cfg.MODEL.RESNETS.BACKBONE_OUT_CHANNELS
RESOLUTION = 4           # ROI / PHRASE_POOLED_SIZE
REP_SIZE = 32            # cfg.MODEL.ROI_BOX_HEAD.MLP_HEAD_DIM
NUM_DET_CLASSES = 151    # hard-coded in forward via .view(-1, 151, 4)
NUM_REL_CLASSES = 16     # cfg.MODEL.RELATION.RELATION_CLASS
HIDDEN_DIM = 1024        # hard-coded in PhraseClassifier
TOPK_TRIPLETS = 10       # cfg.MODEL.RELATION.TOPK_TRIPLETS[-1]
LEAKY_SLOPE = 0.01       # torch.nn.LeakyReLU default
APPLY_REGRESSION = False  # cfg.MODEL.RELATION.APPLY_REGRESSION in this synthetic cfg

IN_DIM = IN_CHANNELS * RESOLUTION * RESOLUTION   # 64


def _round_up(x, m):
    return ((x + m - 1) // m) * m


# lane-padded (128-multiple) dimensions used inside the kernels
K1 = _round_up(IN_DIM, 128)                   # 128   fc6 contraction dim
REP_P = _round_up(REP_SIZE, 128)              # 128   fc6/fc7 output width
CLS_P = _round_up(NUM_DET_CLASSES, 128)       # 256   class-logit width
REL_K = _round_up(3 * REP_SIZE, 128)          # 128   relation fc1 contraction dim (real=96)
REL_P = _round_up(NUM_REL_CLASSES, 128)       # 128   relation-class width
NEG_MASK = -1e30                              # f32 softmax mask for padded logit lanes

MAX_ROW_BLOCK = 512      # v6e/v7x sweet spot; TODO(synk): sweep {128,256} on v5e (spill/vst bound)
MIN_SPLIT_ROWS = 256     # force >=2 grid steps above this so v7x megacore gets both TCs busy
ROW_GRANULE = 16         # bf16 sublane packing -> 16-row granule for row blocks


# ============================ Pallas kernels ============================

def _inst_head_kernel(x_ref, w6_ref, b6_ref, w7_ref, b7_ref, wc_ref, bc_ref,
                      feat_ref, prob_ref):
    """Fused instance head: fc6 -> ReLU -> fc7 -> ReLU -> cls softmax (bf16 dots, f32 math)."""
    x = x_ref[...]                                                       # bf16 [tm, K1]
    h = jnp.dot(x, w6_ref[...], preferred_element_type=jnp.float32) + b6_ref[...]
    h = jnp.maximum(h, 0.0)
    f32 = jnp.dot(h.astype(jnp.bfloat16), w7_ref[...],
                  preferred_element_type=jnp.float32) + b7_ref[...]
    f32 = jnp.maximum(f32, 0.0)
    f = f32.astype(jnp.bfloat16)
    feat_ref[...] = f
    # class logits; padded lanes carry a -1e30 f32 bias -> softmax prob ~0 there
    logits = jnp.dot(f, wc_ref[...], preferred_element_type=jnp.float32) + bc_ref[...]
    m = jnp.max(logits, axis=-1, keepdims=True)
    e = jnp.exp(logits - m)
    prob_ref[...] = e * pl.reciprocal(jnp.sum(e, axis=-1, keepdims=True), approx=True)
    # TODO(synk): if APPLY_REGRESSION is enabled, fuse cls|reg -> one [REP_P, 896] matmul
    # and a single lane-dense store, sliced in JAX (per perf review); dead in eval here.


def _mlp2_kernel(x_ref, w6_ref, b6_ref, w7_ref, b7_ref, o_ref):
    """FPN2MLPFeatureExtractorCustomized body: fc6 -> ReLU -> fc7 -> ReLU (bf16 out)."""
    x = x_ref[...]
    h = jnp.dot(x, w6_ref[...], preferred_element_type=jnp.float32) + b6_ref[...]
    h = jnp.maximum(h, 0.0)
    o = jnp.dot(h.astype(jnp.bfloat16), w7_ref[...],
                preferred_element_type=jnp.float32) + b7_ref[...]
    o_ref[...] = jnp.maximum(o, 0.0).astype(o_ref.dtype)


def _rel_cls_kernel(x_ref, w1_ref, b1_ref, w2_ref, b2_ref, prob_ref):
    """PhraseClassifier: Linear -> LeakyReLU -> Linear -> softmax (logits dropped in eval)."""
    x = x_ref[...]                                                       # bf16 [tm, REL_K]
    h = jnp.dot(x, w1_ref[...], preferred_element_type=jnp.float32) + b1_ref[...]
    h = jnp.where(h > 0, h, LEAKY_SLOPE * h)
    logits = jnp.dot(h.astype(jnp.bfloat16), w2_ref[...],
                     preferred_element_type=jnp.float32) + b2_ref[...]
    m = jnp.max(logits, axis=-1, keepdims=True)
    e = jnp.exp(logits - m)
    prob_ref[...] = e * pl.reciprocal(jnp.sum(e, axis=-1, keepdims=True), approx=True)


# ---------------- generic row-gridded launcher ----------------

def _row_mlp_call(kernel, x, consts, out_desc):
    """Run `kernel` over a 1-D grid of row blocks.

    x:        [N, Kx] activation (Kx already a 128-multiple); cast to bf16 before the call.
    consts:   2-D weight/bias arrays, kept VMEM-resident (full-array block, constant index
              map -> fetched once, never re-DMA'd).
    out_desc: list of (lane_width, dtype) per kernel output (lane widths are 128-multiples).
    Returns a list of [N, d] arrays (padded rows sliced off).
    """
    n, kx = x.shape
    n_g = _round_up(max(n, 1), ROW_GRANULE)
    g = -(-n_g // MAX_ROW_BLOCK)                       # ceil
    if g == 1 and n_g >= MIN_SPLIT_ROWS:
        g = 2                                          # >=2 steps -> both v7x TensorCores work
    tm = _round_up(-(-n_g // g), ROW_GRANULE)
    n_pad = g * tm                                     # tail waste bounded by < ROW_GRANULE*g rows
    if n_pad != n:
        x = jnp.pad(x, ((0, n_pad - n), (0, 0)))
    x = x.astype(jnp.bfloat16)                         # halve HBM->VMEM activation DMA

    in_specs = [pl.BlockSpec((tm, kx), lambda i: (i, 0))]
    for c in consts:
        # full-array block, constant index map: single DMA, VMEM-resident across the grid
        in_specs.append(pl.BlockSpec(c.shape, lambda i: (0, 0)))
    out_specs = tuple(pl.BlockSpec((tm, d), lambda i: (i, 0)) for d, _ in out_desc)
    out_shape = tuple(jax.ShapeDtypeStruct((n_pad, d), dt) for d, dt in out_desc)

    single = len(out_desc) == 1
    outs = pl.pallas_call(
        kernel,
        grid=(g,),
        in_specs=in_specs,
        out_specs=out_specs[0] if single else out_specs,
        out_shape=out_shape[0] if single else out_shape,
        compiler_params=pltpu.CompilerParams(
            dimension_semantics=("parallel",)),        # megacore sharding on v7x
    )(x, *consts)
    outs = (outs,) if single else outs
    return [o[:n] for o in outs]


# ============================ JAX glue ============================

def roi_align_single(feat, boxes, resolution):
    # TODO(synk): exact ROIAlign (Pooler) with sampling_ratio is approximated by one bilinear
    # sample per output cell in plain JAX (data-dependent gather); a PrefetchScalarGridSpec
    # Pallas gather (row indices scalar-prefetched, pl.Element row blocks) is the next
    # optimization at realistic feature-map / proposal counts.
    C, H, W = feat.shape
    R = boxes.shape[0]
    x1, y1, x2, y2 = boxes[:, 0], boxes[:, 1], boxes[:, 2], boxes[:, 3]
    bw = (x2 - x1) / resolution
    bh = (y2 - y1) / resolution
    grid = jnp.arange(resolution, dtype=jnp.float32) + 0.5
    xs = x1[:, None] + grid[None, :] * bw[:, None]
    ys = y1[:, None] + grid[None, :] * bh[:, None]
    y = jnp.broadcast_to(ys[:, :, None], (R, resolution, resolution))
    x = jnp.broadcast_to(xs[:, None, :], (R, resolution, resolution))
    y0 = jnp.clip(jnp.floor(y), 0.0, H - 1)
    x0 = jnp.clip(jnp.floor(x), 0.0, W - 1)
    y1c = jnp.clip(y0 + 1.0, 0.0, H - 1)
    x1c = jnp.clip(x0 + 1.0, 0.0, W - 1)
    wy = jnp.clip(y - y0, 0.0, 1.0)
    wx = jnp.clip(x - x0, 0.0, 1.0)

    def gather(yi, xi):
        v = feat[:, yi.astype(jnp.int32), xi.astype(jnp.int32)]    # [C, R, res, res]
        return jnp.transpose(v, (1, 0, 2, 3))                      # [R, C, res, res]

    v00 = gather(y0, x0)
    v01 = gather(y0, x1c)
    v10 = gather(y1c, x0)
    v11 = gather(y1c, x1c)
    wy_ = wy[:, None]
    wx_ = wx[:, None]
    out = (v00 * (1 - wy_) * (1 - wx_) + v01 * (1 - wy_) * wx_
           + v10 * wy_ * (1 - wx_) + v11 * wy_ * wx_)
    return out                                                     # [R, C, res, res]


def pool_and_flatten(features, boxes_per_img, resolution):
    pooled = [roi_align_single(features[i], b, resolution)
              for i, b in enumerate(boxes_per_img)]
    pooled = jnp.concatenate(pooled, axis=0)                       # [N, C, res, res]
    flat = pooled.reshape(pooled.shape[0], -1)                     # (C, y, x) order == torch .view
    # pad contraction dim to 128 lanes (zeros match the zero-padded fc6 weight rows)
    return jnp.pad(flat, ((0, 0), (0, K1 - flat.shape[1])))


def det_post_processor(class_prob, boxes_per_img):
    # TODO(synk): score-threshold filtering and per-class NMS of the original post_processor
    # are skipped; every proposal is kept (prop_idx = arange), apply_regression=False.
    results = []
    start = 0
    for boxes in boxes_per_img:
        n = boxes.shape[0]
        prob = class_prob[start:start + n]
        fg = prob[:, 1:]
        labels = jnp.argmax(fg, axis=1) + 1
        scores = jnp.max(fg, axis=1)
        results.append({'bbox': boxes, 'scores': scores, 'labels': labels,
                        'prop_idx': jnp.arange(n)})
        start += n
    return results


def make_pair(n):
    id_i, id_j = np.meshgrid(np.arange(n), np.arange(n), indexing='ij')
    id_i = id_i.reshape(-1)
    id_j = id_j.reshape(-1)
    diag = np.arange(n) * n + np.arange(n)
    sel = np.setdiff1d(np.arange(len(id_i)), diag)
    if len(sel) != 0:
        id_i = id_i[sel]
        id_j = id_j[sel]
    return np.vstack((id_i, id_j))


def make_connection(det_results):
    # eval mode: no MAX_PROPOSAL_PAIR top-k filtering
    connected = []
    for det in det_results:
        n = det['bbox'].shape[0]
        conn = jnp.asarray(make_pair(n), dtype=jnp.int32)
        connected.append({'intance_proposal_boxes': det, 'connect_arr': conn})
    return connected


def build_phrase_region(connected_results):
    phrase_proposals = []
    for c in connected_results:
        conn = c['connect_arr']
        boxes = c['intance_proposal_boxes']['bbox']
        sub = boxes[conn[0]]
        obj = boxes[conn[1]]
        # TODO(synk): phrase_boxlist_union PHRASE_CLUSTER de-duplication is skipped;
        # each pair keeps its own union box, cluster index = arange.
        union = jnp.stack([jnp.minimum(sub[:, 0], obj[:, 0]),
                           jnp.minimum(sub[:, 1], obj[:, 1]),
                           jnp.maximum(sub[:, 2], obj[:, 2]),
                           jnp.maximum(sub[:, 3], obj[:, 3])], axis=1)
        c['phrase_proposal_idx'] = jnp.arange(conn.shape[1])
        c['phrase_proposal_boxes'] = union
        phrase_proposals.append(union)
    return phrase_proposals


def rel_classify(inst_feats, phr_feats, inst_sizes, phr_sizes,
                 connect_mats, phrase_idxs, rel_params):
    """Per-image gathers in JAX on REAL 32-wide features, then ONE batched Pallas call.

    inst_feats: [sum(inst), REP_SIZE] bf16 (already sliced to real columns).
    phr_feats:  [sum(phrase), REP_P]  bf16 (padded; real columns sliced here).
    """
    # TODO(synk): per-image XLA gathers/slices dominate at realistic pair counts; move them
    # into a PrefetchScalarGridSpec Pallas gather as the next optimization.
    start_i, start_p = 0, 0
    feats = []
    for img_id in range(len(inst_sizes)):
        isz, psz = inst_sizes[img_id], phr_sizes[img_id]
        conn = connect_mats[img_id]
        pidx = phrase_idxs[img_id]
        inst = inst_feats[start_i:start_i + isz]                 # [isz, 32]
        phra = phr_feats[start_p:start_p + psz, :REP_SIZE]       # [psz, 32]
        feats.append(jnp.concatenate([inst[conn[0]], inst[conn[1]], phra[pidx]], axis=1))
        start_i += isz
        start_p += psz
    feat_all = jnp.concatenate(feats, axis=0)                    # [sum(pairs), 96]
    feat_all = jnp.pad(feat_all, ((0, 0), (0, REL_K - feat_all.shape[1])))   # -> [*, 128]
    (prob_p,) = _row_mlp_call(_rel_cls_kernel, feat_all, list(rel_params),
                              [(REL_P, jnp.float32)])
    return prob_p[:, :NUM_REL_CLASSES]                           # rel_logits dropped (eval)


def rel_postprocess(rel_probs, det_results, connect_arrs, topk=TOPK_TRIPLETS):
    start = 0
    out = []
    for det, conn in zip(det_results, connect_arrs):
        rel_len = conn.shape[1]
        prob = rel_probs[start:start + rel_len]
        start += rel_len
        prob = prob.at[:, 0].set(0.0)                  # zero background relation
        phrase_prob = jnp.max(prob, axis=1)
        phrase_label = jnp.argmax(prob, axis=1)
        sub_scores = det['scores'][conn[0]]
        obj_scores = det['scores'][conn[1]]
        overall = phrase_prob * sub_scores * obj_scores
        k = min(topk, int(overall.shape[0]))
        _, topk_idx = jax.lax.top_k(overall, k)
        out.append({'instances': det,
                    'pair_idx': conn[:, topk_idx].T,
                    'phrase_label': phrase_label[topk_idx],
                    'phrase_score': phrase_prob[topk_idx]})
    return out


def det_proposal_relation_head_forward(features, obj_proposals, params):
    """Eval-mode forward of DetProposalRelationHead (training subsampling / losses skipped)."""
    # instance path: pooler + fused fc6/fc7/cls-softmax Pallas kernel (single launch)
    inst_x = pool_and_flatten(features, obj_proposals, RESOLUTION)
    inst_feats, prob_p = _row_mlp_call(
        _inst_head_kernel, inst_x,
        [params['inst_fc6_w'], params['inst_fc6_b'],
         params['inst_fc7_w'], params['inst_fc7_b'],
         params['cls_w'], params['cls_b']],
        [(REP_P, jnp.bfloat16), (CLS_P, jnp.float32)])
    det_class_prob = prob_p[:, :NUM_DET_CLASSES]
    # Box regression is elided: APPLY_REGRESSION=False means det_box_regression never affects
    # any output in eval mode (dead MXU work + 640-lane store removed per perf review).

    init_prop_size = [b.shape[0] for b in obj_proposals]
    det_result = det_post_processor(det_class_prob, obj_proposals)
    connection_results = make_connection(det_result)
    phrase_proposals = build_phrase_region(connection_results)
    phrase_indexs = [c['phrase_proposal_idx'] for c in connection_results]
    instance_connect_arr = [c['connect_arr'] for c in connection_results]
    instance_proposal_size = [c['intance_proposal_boxes']['bbox'].shape[0]
                              for c in connection_results]
    phr_prop_sizes = [b.shape[0] for b in phrase_proposals]

    # phrase path: pooler + fc6/fc7 Pallas kernel, one batched call over all phrase boxes
    phr_x = pool_and_flatten(features, phrase_proposals, RESOLUTION)
    (phrase_feats,) = _row_mlp_call(
        _mlp2_kernel, phr_x,
        [params['phr_fc6_w'], params['phr_fc6_b'],
         params['phr_fc7_w'], params['phr_fc7_b']],
        [(REP_P, jnp.bfloat16)])

    # kept instance features (prop_idx keeps all proposals here); slice to the REAL 32
    # feature columns before gathering so the relation path never moves the 96 padded lanes.
    kept_instance_features = []
    start = 0
    for idx, sz in enumerate(init_prop_size):
        prop_idx = det_result[idx]['prop_idx']
        kept_instance_features.append(inst_feats[start:start + sz, :REP_SIZE][prop_idx])
        start += sz
    kept_instance_features_concated = jnp.concatenate(kept_instance_features, axis=0)
    # kept_regressions loop of the reference is skipped entirely (consumed only when
    # APPLY_REGRESSION=True); FEATURE_REFINE.MASSAGE_PASSING = 0 in this synthetic cfg.

    rel_probs = rel_classify(
        kept_instance_features_concated, phrase_feats,
        instance_proposal_size, phr_prop_sizes,
        instance_connect_arr, phrase_indexs,
        (params['rel_w1'], params['rel_b1'], params['rel_w2'], params['rel_b2']))

    rel_result = rel_postprocess(rel_probs, det_result, instance_connect_arr)
    det_loss, rel_loss = {}, {}          # eval mode: losses not computed
    return det_result, rel_result, det_loss, rel_loss


# ---------------- parameter padding (lane-dense, bf16 weights / f32 biases) ----------------

def _pad2(w, r_pad, c_pad):
    return jnp.pad(w, ((0, r_pad - w.shape[0]), (0, c_pad - w.shape[1])))


def _pad_bias_neg(b, c_pad):
    # f32 mask bias: padded logit lanes get -1e30 so softmax assigns them ~0 probability.
    out = jnp.full((1, c_pad), NEG_MASK, jnp.float32)
    return out.at[:, :b.shape[1]].set(b)


def pad_params(p):
    """Zero-pad to 128-lane-multiple shapes; weights bf16 (MXU), biases f32 (post-dot add)."""
    bf = jnp.bfloat16
    pp = {}
    pp['inst_fc6_w'] = _pad2(p['inst_fc6_w'], K1, REP_P).astype(bf)
    pp['inst_fc6_b'] = _pad2(p['inst_fc6_b'], 1, REP_P)
    pp['inst_fc7_w'] = _pad2(p['inst_fc7_w'], REP_P, REP_P).astype(bf)
    pp['inst_fc7_b'] = _pad2(p['inst_fc7_b'], 1, REP_P)
    pp['phr_fc6_w'] = _pad2(p['phr_fc6_w'], K1, REP_P).astype(bf)
    pp['phr_fc6_b'] = _pad2(p['phr_fc6_b'], 1, REP_P)
    pp['phr_fc7_w'] = _pad2(p['phr_fc7_w'], REP_P, REP_P).astype(bf)
    pp['phr_fc7_b'] = _pad2(p['phr_fc7_b'], 1, REP_P)
    pp['cls_w'] = _pad2(p['cls_w'], REP_P, CLS_P).astype(bf)
    pp['cls_b'] = _pad_bias_neg(p['cls_b'], CLS_P)      # softmax mask on padded class lanes
    # relation fc1: real contraction is the dense 3*REP_SIZE=96 columns, padded once to 128
    pp['rel_w1'] = _pad2(p['rel_w1'], REL_K, HIDDEN_DIM).astype(bf)
    pp['rel_b1'] = p['rel_b1']                          # (1, 1024) already lane-aligned, f32
    pp['rel_w2'] = _pad2(p['rel_w2'], HIDDEN_DIM, REL_P).astype(bf)
    pp['rel_b2'] = _pad_bias_neg(p['rel_b2'], REL_P)    # softmax mask on padded relation lanes
    return pp


# ============================ main ============================

if __name__ == "__main__":
    key = jax.random.PRNGKey(0)
    keys = jax.random.split(key, 12)

    # features: [B, C, H, W]  (layout: NCHW, same as PyTorch)
    B, C, H, W = 2, IN_CHANNELS, 16, 16
    features = jax.random.normal(keys[0], (B, C, H, W), jnp.float32)

    # 4 proposal boxes per image, (x1, y1, x2, y2) in feature-map coordinates
    n_props = 4

    def make_boxes(k):
        xy = jax.random.uniform(k, (n_props, 2), minval=0.0, maxval=W / 2)
        wh = jax.random.uniform(jax.random.fold_in(k, 1), (n_props, 2),
                                minval=2.0, maxval=W / 2)
        return jnp.concatenate([xy, jnp.minimum(xy + wh, W - 1.0)], axis=1)

    obj_proposals = [make_boxes(keys[1]), make_boxes(keys[2])]

    def lin(k, din, dout, scale=0.02):
        kw, kb = jax.random.split(k)
        return (scale * jax.random.normal(kw, (din, dout), jnp.float32),
                scale * jax.random.normal(kb, (1, dout), jnp.float32))

    raw = {}
    raw['inst_fc6_w'], raw['inst_fc6_b'] = lin(keys[3], IN_DIM, REP_SIZE)
    raw['inst_fc7_w'], raw['inst_fc7_b'] = lin(keys[4], REP_SIZE, REP_SIZE)
    raw['phr_fc6_w'], raw['phr_fc6_b'] = lin(keys[5], IN_DIM, REP_SIZE)
    raw['phr_fc7_w'], raw['phr_fc7_b'] = lin(keys[6], REP_SIZE, REP_SIZE)
    raw['cls_w'], raw['cls_b'] = lin(keys[7], REP_SIZE, NUM_DET_CLASSES)
    raw['rel_w1'], raw['rel_b1'] = lin(keys[9], 3 * REP_SIZE, HIDDEN_DIM)
    raw['rel_w2'], raw['rel_b2'] = lin(keys[10], HIDDEN_DIM, NUM_REL_CLASSES)
    # NOTE: reg_w/reg_b (the 151*4 box-regression predictor) are not instantiated since the
    # branch is dead with APPLY_REGRESSION=False.

    params = pad_params(raw)

    det_result, rel_result, det_loss, rel_loss = det_proposal_relation_head_forward(
        features, obj_proposals, params)

    jax.block_until_ready(det_result[0]['scores'])
    jax.block_until_ready(rel_result[0]['phrase_score'])
    jax.block_until_ready(rel_result[-1]['pair_idx'])
    print("KERNEL_OK")
</pallas_src>

<mosaic_0001>
module attributes {stable_mosaic.version = 11 : i64} {
  func.func @_inst_head_kernel(%arg0: i32, %arg1: memref<16x128xbf16, #tpu.memory_space<vmem>>, %arg2: memref<128x128xbf16, #tpu.memory_space<vmem>>, %arg3: memref<1x128xf32, #tpu.memory_space<vmem>>, %arg4: memref<128x128xbf16, #tpu.memory_space<vmem>>, %arg5: memref<1x128xf32, #tpu.memory_space<vmem>>, %arg6: memref<128x256xbf16, #tpu.memory_space<vmem>>, %arg7: memref<1x256xf32, #tpu.memory_space<vmem>>, %arg8: memref<16x128xbf16, #tpu.memory_space<vmem>>, %arg9: memref<16x256xf32, #tpu.memory_space<vmem>>) attributes {dimension_semantics = [#tpu.dimension_semantics<parallel>], iteration_bounds = array<i64: 1>, scalar_prefetch = 0 : i64, scratch_operands = 0 : i64, tpu.core_type = #tpu.core_type<tc>, window_params = [{transform_indices = @transform_0, window_bounds = array<i64: 16, 128>}, {pipeline_mode = #tpu.pipeline_mode<synchronous>, transform_indices = @transform_1, window_bounds = array<i64: 128, 128>}, {pipeline_mode = #tpu.pipeline_mode<synchronous>, transform_indices = @transform_2, window_bounds = array<i64: 1, 128>}, {pipeline_mode = #tpu.pipeline_mode<synchronous>, transform_indices = @transform_3, window_bounds = array<i64: 128, 128>}, {pipeline_mode = #tpu.pipeline_mode<synchronous>, transform_indices = @transform_4, window_bounds = array<i64: 1, 128>}, {pipeline_mode = #tpu.pipeline_mode<synchronous>, transform_indices = @transform_5, window_bounds = array<i64: 128, 256>}, {pipeline_mode = #tpu.pipeline_mode<synchronous>, transform_indices = @transform_6, window_bounds = array<i64: 1, 256>}, {transform_indices = @transform_7, window_bounds = array<i64: 16, 128>}, {transform_indices = @transform_8, window_bounds = array<i64: 16, 256>}]} {
    %c0 = arith.constant 0 : index
    %c0_0 = arith.constant 0 : index
    %0 = vector.load %arg1[%c0, %c0_0] : memref<16x128xbf16, #tpu.memory_space<vmem>>, vector<16x128xbf16>
    %c0_1 = arith.constant 0 : index
    %c0_2 = arith.constant 0 : index
    %1 = vector.load %arg2[%c0_1, %c0_2] : memref<128x128xbf16, #tpu.memory_space<vmem>>, vector<128x128xbf16>
    %cst = arith.constant dense<0.000000e+00> : vector<16x128xf32>
    %2 = tpu.matmul %0, %1, %cst {dimension_numbers = #tpu.dot_dimension_numbers<[1], [0], [0], [1], [0, 0, 1, 1], [], []>} : vector<16x128xbf16>, vector<128x128xbf16>, vector<16x128xf32> -> vector<16x128xf32>
    %c0_3 = arith.constant 0 : index
    %c0_4 = arith.constant 0 : index
    %3 = vector.load %arg3[%c0_3, %c0_4] : memref<1x128xf32, #tpu.memory_space<vmem>>, vector<1x128xf32>
    %4 = vector.broadcast %3 : vector<1x128xf32> to vector<16x128xf32>
    %5 = arith.addf %2, %4 : vector<16x128xf32>
    %cst_5 = arith.constant 0.000000e+00 : f32
    %6 = vector.broadcast %cst_5 : f32 to vector<16x128xf32>
    %7 = arith.maximumf %5, %6 : vector<16x128xf32>
    %8 = arith.truncf %7 : vector<16x128xf32> to vector<16x128xbf16>
    %c0_6 = arith.constant 0 : index
    %c0_7 = arith.constant 0 : index
    %9 = vector.load %arg4[%c0_6, %c0_7] : memref<128x128xbf16, #tpu.memory_space<vmem>>, vector<128x128xbf16>
    %cst_8 = arith.constant dense<0.000000e+00> : vector<16x128xf32>
    %10 = tpu.matmul %8, %9, %cst_8 {dimension_numbers = #tpu.dot_dimension_numbers<[1], [0], [0], [1], [0, 0, 1, 1], [], []>} : vector<16x128xbf16>, vector<128x128xbf16>, vector<16x128xf32> -> vector<16x128xf32>
    %c0_9 = arith.constant 0 : index
    %c0_10 = arith.constant 0 : index
    %11 = vector.load %arg5[%c0_9, %c0_10] : memref<1x128xf32, #tpu.memory_space<vmem>>, vector<1x128xf32>
    %12 = vector.broadcast %11 : vector<1x128xf32> to vector<16x128xf32>
    %13 = arith.addf %10, %12 : vector<16x128xf32>
    %cst_11 = arith.constant 0.000000e+00 : f32
    %14 = vector.broadcast %cst_11 : f32 to vector<16x128xf32>
    %15 = arith.maximumf %13, %14 : vector<16x128xf32>
    %16 = arith.truncf %15 : vector<16x128xf32> to vector<16x128xbf16>
    %c0_12 = arith.constant 0 : index
    %c0_13 = arith.constant 0 : index
    %17 = vector.load %arg8[%c0_12, %c0_13] : memref<16x128xbf16, #tpu.memory_space<vmem>>, vector<16x128xbf16>
    tpu.vector_store %arg8[%c0_12, %c0_13], %16 {strides = array<i32>} : memref<16x128xbf16, #tpu.memory_space<vmem>>, vector<16x128xbf16>,
    %c0_14 = arith.constant 0 : index
    %c0_15 = arith.constant 0 : index
    %18 = vector.load %arg6[%c0_14, %c0_15] : memref<128x256xbf16, #tpu.memory_space<vmem>>, vector<128x256xbf16>
    %cst_16 = arith.constant dense<0.000000e+00> : vector<16x256xf32>
    %19 = tpu.matmul %16, %18, %cst_16 {dimension_numbers = #tpu.dot_dimension_numbers<[1], [0], [0], [1], [0, 0, 1, 1], [], []>} : vector<16x128xbf16>, vector<128x256xbf16>, vector<16x256xf32> -> vector<16x256xf32>
    %c0_17 = arith.constant 0 : index
    %c0_18 = arith.constant 0 : index
    %20 = vector.load %arg7[%c0_17, %c0_18] : memref<1x256xf32, #tpu.memory_space<vmem>>, vector<1x256xf32>
    %21 = vector.broadcast %20 : vector<1x256xf32> to vector<16x256xf32>
    %22 = arith.addf %19, %21 : vector<16x256xf32>
    %cst_19 = arith.constant dense<0xFF800000> : vector<16xf32>
    %23 = vector.multi_reduction <maximumf>, %22, %cst_19 [1] : vector<16x256xf32> to vector<16xf32>
    %24 = vector.shape_cast %23 : vector<16xf32> to vector<16x1xf32>
    %25 = vector.broadcast %24 : vector<16x1xf32> to vector<16x256xf32>
    %26 = arith.subf %22, %25 : vector<16x256xf32>
    %27 = math.exp %26 : vector<16x256xf32>
    %cst_20 = arith.constant dense<0.000000e+00> : vector<16xf32>
    %28 = vector.multi_reduction <add>, %27, %cst_20 [1] : vector<16x256xf32> to vector<16xf32>
    %29 = vector.shape_cast %28 : vector<16xf32> to vector<16x1xf32>
    %30 = tpu.reciprocal %29 {approx = true} : vector<16x1xf32> -> vector<16x1xf32>
    %31 = vector.broadcast %30 : vector<16x1xf32> to vector<16x256xf32>
    %32 = arith.mulf %27, %31 : vector<16x256xf32>
    %c0_21 = arith.constant 0 : index
    %c0_22 = arith.constant 0 : index
    %33 = vector.load %arg9[%c0_21, %c0_22] : memref<16x256xf32, #tpu.memory_space<vmem>>, vector<16x256xf32>
    tpu.vector_store %arg9[%c0_21, %c0_22], %32 {strides = array<i32>} : memref<16x256xf32, #tpu.memory_space<vmem>>, vector<16x256xf32>,
    return
  }
  func.func @transform_0(%arg0: i32) -> (i32, i32) {
    %c0_i32 = arith.constant 0 : i32
    %c0_i32_0 = arith.constant 0 : i32
    return %arg0, %c0_i32 : i32, i32
  }
  func.func @transform_1(%arg0: i32) -> (i32, i32) {
    %c0_i32 = arith.constant 0 : i32
    %c0_i32_0 = arith.constant 0 : i32
    %c0_i32_1 = arith.constant 0 : i32
    return %c0_i32, %c0_i32_0 : i32, i32
  }
  func.func @transform_2(%arg0: i32) -> (i32, i32) {
    %c0_i32 = arith.constant 0 : i32
    %c0_i32_0 = arith.constant 0 : i32
    %c0_i32_1 = arith.constant 0 : i32
    return %c0_i32, %c0_i32_0 : i32, i32
  }
  func.func @transform_3(%arg0: i32) -> (i32, i32) {
    %c0_i32 = arith.constant 0 : i32
    %c0_i32_0 = arith.constant 0 : i32
    %c0_i32_1 = arith.constant 0 : i32
    return %c0_i32, %c0_i32_0 : i32, i32
  }
  func.func @transform_4(%arg0: i32) -> (i32, i32) {
    %c0_i32 = arith.constant 0 : i32
    %c0_i32_0 = arith.constant 0 : i32
    %c0_i32_1 = arith.constant 0 : i32
    return %c0_i32, %c0_i32_0 : i32, i32
  }
  func.func @transform_5(%arg0: i32) -> (i32, i32) {
    %c0_i32 = arith.constant 0 : i32
    %c0_i32_0 = arith.constant 0 : i32
    %c0_i32_1 = arith.constant 0 : i32
    return %c0_i32, %c0_i32_0 : i32, i32
  }
  func.func @transform_6(%arg0: i32) -> (i32, i32) {
    %c0_i32 = arith.constant 0 : i32
    %c0_i32_0 = arith.constant 0 : i32
    %c0_i32_1 = arith.constant 0 : i32
    return %c0_i32, %c0_i32_0 : i32, i32
  }
  func.func @transform_7(%arg0: i32) -> (i32, i32) {
    %c0_i32 = arith.constant 0 : i32
    %c0_i32_0 = arith.constant 0 : i32
    return %arg0, %c0_i32 : i32, i32
  }
  func.func @transform_8(%arg0: i32) -> (i32, i32) {
    %c0_i32 = arith.constant 0 : i32
    %c0_i32_0 = arith.constant 0 : i32
    return %arg0, %c0_i32 : i32, i32
  }
}

</mosaic_0001>

<llo_original>
// kernel: tpu_custom_call.1
$region0: #{tpu_custom_call.1}
  #allocation0 [shape = 'u32[]', space=smem, size = 0x4, offset = 0x4, fixed_abs, tag = 'smem constant byte address 0x4 - core index']
  #allocation1 [shape = 'u32[144,128]{1,0:T(1,128)}', space=vmem, size = 0x12000, scoped, tag = 'internal scratch']
  %s0 = inlined_call_operand.hbm [shape: bf16[16,128], index: 0, kind: input, shape index: {}]
  %s1 = inlined_call_operand.hbm [shape: bf16[128,128], index: 1, kind: input, shape index: {}]
  %s2 = inlined_call_operand.vmem [shape: f32[1,128], index: 2, kind: input, shape index: {}]
  %s3 = inlined_call_operand.hbm [shape: bf16[128,128], index: 3, kind: input, shape index: {}]
  %s4 = inlined_call_operand.vmem [shape: f32[1,128], index: 4, kind: input, shape index: {}]
  %s5 = inlined_call_operand.hbm [shape: bf16[128,256], index: 5, kind: input, shape index: {}]
  %s6 = inlined_call_operand.vmem [shape: f32[1,256], index: 6, kind: input, shape index: {}]
  %s7 = inlined_call_operand.hbm [shape: bf16[16,128], index: 7, kind: output, shape index: {0}]
  %s8 = inlined_call_operand.hbm [shape: f32[16,256], index: 8, kind: output, shape index: {1}]
  %9 = xla_tuple %s7, %s8
  %s10 = sld [smem:[#allocation0]]
  $region62: #{tpu_custom_call.1} parent=0
    _
  %s12 = ssub.s32 1, %s10
  %s13 = scalar_select 0, %s12, %s10
  $region1: #{tpu_custom_call.1} parent=0
    #allocation2 [shape = 'u8[4096]{0}', space=vmem, size = 0x1000, scoped, tag = 'input window, operand 0, single buffered']
    #allocation3 [shape = 's32[1]{0}', space=sflag, size = 0x4, scoped, tag = 'scoped memory for tpu_custom_call.1']
    #allocation4 [shape = 's32[1]{0}', space=sflag, size = 0x4, scoped, tag = 'scoped memory for tpu_custom_call.1']
    #allocation5 [shape = 'u8[32768]{0}', space=vmem, size = 0x8000, scoped, tag = 'input window, operand 1, single buffered']
    #allocation6 [shape = 's32[1]{0}', space=sflag, size = 0x4, scoped, tag = 'scoped memory for tpu_custom_call.1']
    #allocation7 [shape = 'u8[32768]{0}', space=vmem, size = 0x8000, scoped, tag = 'input window, operand 3, single buffered']
    #allocation8 [shape = 'u8[65536]{0}', space=vmem, size = 0x10000, scoped, tag = 'input window, operand 5, single buffered']
    #allocation9 [shape = 's32[1]{0}', space=sflag, size = 0x4, scoped, tag = 'scoped memory for tpu_custom_call.1']
    #allocation10 [shape = 'u8[4096]{0}', space=vmem, size = 0x1000, scoped, tag = 'output window, operand 0, single buffered']
    #allocation11 [shape = 'u8[16384]{0}', space=vmem, size = 0x4000, scoped, tag = 'output window, operand 1, single buffered']
    #allocation12 [shape = 's32[1]{0}', space=sflag, size = 0x4, scoped, tag = 'scoped memory for tpu_custom_call.1']
    %14 = vsyncpa [#allocation3], 0
    %15 = vsyncpa [#allocation6], 0
    %16 = vsyncpa [#allocation9], 0
    %17 = vsyncpa [#allocation4], 0
    %18 = vsyncpa [#allocation12], 0
    // Predicated region
    $region2: #{tpu_custom_call.1} parent=1 // pred_check
      _
    $region3: #{tpu_custom_call.1} parent=1 // pred_check_branch
      %20 = sbr.rel (0) target = $region5
    $region4: #{tpu_custom_call.1} parent=1 // pred_region
      %s22 = ssub.s32 128, 128
      %23 = vsyncadd [#allocation3], %s22
      %s24 = sshll.u32 [#allocation2], 4
      %s25 = int_to_ptr.vmem [resolvable:$true] %s24
      %30 = dma.hbm_to_vmem [thread:$0]  %s0, 128, %s25, [#allocation3], 64, 64, 4
    $region5: #{tpu_custom_call.1} parent=1 // pred_fallthru
      _
    // Predicated region
    $region6: #{tpu_custom_call.1} parent=1 // pred_check
      _
    $region7: #{tpu_custom_call.1} parent=1 // pred_check_branch
      %32 = sbr.rel (0) target = $region9
    $region8: #{tpu_custom_call.1} parent=1 // pred_region
      %s34 = ssub.s32 1024, 1024
      %35 = vsyncadd [#allocation6], %s34
      %s36 = sshll.u32 [#allocation5], 4
      %s37 = int_to_ptr.vmem [resolvable:$true] %s36
      %42 = dma.hbm_to_vmem [thread:$0]  %s1, 1024, %s37, [#allocation6], 64, 64, 4
    $region9: #{tpu_custom_call.1} parent=1 // pred_fallthru
      _
    // Predicated region
    $region10: #{tpu_custom_call.1} parent=1 // pred_check
      _
    $region11: #{tpu_custom_call.1} parent=1 // pred_check_branch
      %44 = sbr.rel (0) target = $region13
    $region12: #{tpu_custom_call.1} parent=1 // pred_region
      _
    $region13: #{tpu_custom_call.1} parent=1 // pred_fallthru
      _
    // Predicated region
    $region14: #{tpu_custom_call.1} parent=1 // pred_check
      _
    $region15: #{tpu_custom_call.1} parent=1 // pred_check_branch
      %46 = sbr.rel (0) target = $region17
    $region16: #{tpu_custom_call.1} parent=1 // pred_region
      %s48 = ssub.s32 1024, 1024
      %49 = vsyncadd [#allocation6], %s48
      %s50 = sshll.u32 [#allocation7], 4
      %s51 = int_to_ptr.vmem [resolvable:$true] %s50
      %56 = dma.hbm_to_vmem [thread:$0]  %s3, 1024, %s51, [#allocation6], 64, 64, 4
    $region17: #{tpu_custom_call.1} parent=1 // pred_fallthru
      _
    // Predicated region
    $region18: #{tpu_custom_call.1} parent=1 // pred_check
      _
    $region19: #{tpu_custom_call.1} parent=1 // pred_check_branch
      %58 = sbr.rel (0) target = $region21
    $region20: #{tpu_custom_call.1} parent=1 // pred_region
      _
    $region21: #{tpu_custom_call.1} parent=1 // pred_fallthru
      _
    // Predicated region
    $region22: #{tpu_custom_call.1} parent=1 // pred_check
      _
    $region23: #{tpu_custom_call.1} parent=1 // pred_check_branch
      %60 = sbr.rel (0) target = $region25
    $region24: #{tpu_custom_call.1} parent=1 // pred_region
      %s62 = ssub.s32 2048, 2048
      %63 = vsyncadd [#allocation9], %s62
      %s64 = sshll.u32 [#allocation8], 4
      %s65 = int_to_ptr.vmem [resolvable:$true] %s64
      %70 = dma.hbm_to_vmem [thread:$0]  %s5, 2048, %s65, [#allocation9], 128, 128, 8
    $region25: #{tpu_custom_call.1} parent=1 // pred_fallthru
      _
    // Predicated region
    $region26: #{tpu_custom_call.1} parent=1 // pred_check
      _
    $region27: #{tpu_custom_call.1} parent=1 // pred_check_branch
      %72 = sbr.rel (0) target = $region29
    $region28: #{tpu_custom_call.1} parent=1 // pred_region
      _
    $region29: #{tpu_custom_call.1} parent=1 // pred_fallthru
      _
    // Predicated region
    $region30: #{tpu_custom_call.1} parent=1 // pred_check
      _
    $region31: #{tpu_custom_call.1} parent=1 // pred_check_branch
      %74 = sbr.rel (0) target = $region33
    $region32: #{tpu_custom_call.1} parent=1 // pred_region
      %75 = dma.done [#allocation3], 128
    $region33: #{tpu_custom_call.1} parent=1 // pred_fallthru
      _
    // Predicated region
    $region34: #{tpu_custom_call.1} parent=1 // pred_check
      _
    $region35: #{tpu_custom_call.1} parent=1 // pred_check_branch
      %77 = sbr.rel (0) target = $region37
    $region36: #{tpu_custom_call.1} parent=1 // pred_region
      %78 = dma.done [#allocation6], 1024
    $region37: #{tpu_custom_call.1} parent=1 // pred_fallthru
      _
    // Predicated region
    $region38: #{tpu_custom_call.1} parent=1 // pred_check
      _
    $region39: #{tpu_custom_call.1} parent=1 // pred_check_branch
      %80 = sbr.rel (0) target = $region41
    $region40: #{tpu_custom_call.1} parent=1 // pred_region
      %81 = dma.done [#allocation6], 1024
    $region41: #{tpu_custom_call.1} parent=1 // pred_fallthru
      _
    // Predicated region
    $region42: #{tpu_custom_call.1} parent=1 // pred_check
      _
    $region43: #{tpu_custom_call.1} parent=1 // pred_check_branch
      %83 = sbr.rel (0) target = $region45
    $region44: #{tpu_custom_call.1} parent=1 // pred_region
      %84 = dma.done [#allocation9], 2048
    $region45: #{tpu_custom_call.1} parent=1 // pred_fallthru
      _
    %v86 = vld [vmem:[#allocation2] sm:$0xf]
    %v87 = vld [vmem:[#allocation2 + $0x4] sm:$0xf]
    %v88 = vld [vmem:[#allocation5] sm:$0xf]
    %v89 = vld [vmem:[#allocation5 + $0x4] sm:$0xf]
    %v90 = vld [vmem:[#allocation5 + $0x8] sm:$0xf]
    %v91 = vld [vmem:[#allocation5 + $0xc] sm:$0xf]
    %v92 = vld [vmem:[#allocation5 + $0x10] sm:$0xf]
    %v93 = vld [vmem:[#allocation5 + $0x14] sm:$0xf]
    %v94 = vld [vmem:[#allocation5 + $0x18] sm:$0xf]
    %v95 = vld [vmem:[#allocation5 + $0x1c] sm:$0xf]
    %v96 = vld [vmem:[#allocation5 + $0x20] sm:$0xf]
    %v97 = vld [vmem:[#allocation5 + $0x24] sm:$0xf]
    %v98 = vld [vmem:[#allocation5 + $0x28] sm:$0xf]
    %v99 = vld [vmem:[#allocation5 + $0x2c] sm:$0xf]
    %v100 = vld [vmem:[#allocation5 + $0x30] sm:$0xf]
    %v101 = vld [vmem:[#allocation5 + $0x34] sm:$0xf]
    %v102 = vld [vmem:[#allocation5 + $0x38] sm:$0xf]
    %v103 = vld [vmem:[#allocation5 + $0x3c] sm:$0xf]
    %v104 = vld [vmem:[%s2] sm:$0x1]
    %v106 = vlaneseq
    %v107 = vshrl.u32 %v106, 7
    %v108 = vsub.s32 0, %v107
    %v109 = vrot.slane %v104, %v108
    %v113 = vunpack.c.l.b16 %v86
    %v114 = vunpack.c.l.b16 %v87
    %v115 = vpack.c.b16 %v114, %v113
    %v133 = vunpack.c.l.b16 %v88
    %v134 = vunpack.c.l.b16 %v89
    %v135 = vunpack.c.l.b16 %v90
    %v136 = vunpack.c.l.b16 %v91
    %v137 = vunpack.c.l.b16 %v92
    %v138 = vunpack.c.l.b16 %v93
    %v139 = vunpack.c.l.b16 %v94
    %v140 = vunpack.c.l.b16 %v95
    %v141 = vunpack.c.l.b16 %v96
    %v142 = vunpack.c.l.b16 %v97
    %v143 = vunpack.c.l.b16 %v98
    %v144 = vunpack.c.l.b16 %v99
    %v145 = vunpack.c.l.b16 %v100
    %v146 = vunpack.c.l.b16 %v101
    %v147 = vunpack.c.l.b16 %v102
    %v148 = vunpack.c.l.b16 %v103
    %v149 = vpack.c.b16 %v134, %v133
    %v150 = vpack.c.b16 %v136, %v135
    %v151 = vpack.c.b16 %v138, %v137
    %v152 = vpack.c.b16 %v140, %v139
    %v153 = vpack.c.b16 %v142, %v141
    %v154 = vpack.c.b16 %v144, %v143
    %v155 = vpack.c.b16 %v146, %v145
    %v156 = vpack.c.b16 %v148, %v147
    %165 = vmatprep.subr.bf16.mxu0 0
    %166 = vmatpush1.bf16.msra.mxu0 %v149
    %167 = vmatprep.subr.bf16.mxu0 0
    %168 = vmatpush1.bf16.msra.mxu0 %v150
    %169 = vmatprep.subr.bf16.mxu0 0
    %170 = vmatpush1.bf16.msra.mxu0 %v151
    %171 = vmatprep.subr.bf16.mxu0 0
    %172 = vmatpush1.bf16.msra.mxu0 %v152
    %173 = vmatprep.subr.bf16.mxu0 0
    %174 = vmatpush1.bf16.msra.mxu0 %v153
    %175 = vmatprep.subr.bf16.mxu0 0
    %176 = vmatpush1.bf16.msra.mxu0 %v154
    %177 = vmatprep.subr.bf16.mxu0 0
    %178 = vmatpush1.bf16.msra.mxu0 %v155
    %179 = vmatprep.subr.bf16.mxu0 0
    %180 = vmatpush1.bf16.msra.mxu0 %v156
    %181 = vmatprep.subr.bf16.mxu0 0
    %182 = vmatpush1.bf16.msra.mxu0 0
    %183 = vmatprep.subr.bf16.mxu0 0
    %184 = vmatpush1.bf16.msra.mxu0 0
    %185 = vmatprep.subr.bf16.mxu0 0
    %186 = vmatpush1.bf16.msra.mxu0 0
    %187 = vmatprep.subr.bf16.mxu0 0
    %188 = vmatpush1.bf16.msra.mxu0 0
    %189 = vmatprep.subr.bf16.mxu0 0
    %190 = vmatpush1.bf16.msra.mxu0 0
    %191 = vmatprep.subr.bf16.mxu0 0
    %192 = vmatpush1.bf16.msra.mxu0 0
    %193 = vmatprep.subr.bf16.mxu0 0
    %194 = vmatpush1.bf16.msra.mxu0 0
    %195 = vmatprep.subr.bf16.mxu0 0
    %196 = vmatpush1.bf16.msra.mxu0 0
    %197 = vmatprep.mubr.bf16.mxu0 0
    %198 = vmatmul.mubr.bf16.gmra.mrb[0].mxu0 %v115
    %v199 = vpop.f32.mrb[0].mxu0
    %v200 = vadd.f32 %v109, %v199
    %v201 = vpop.f32.mrb[0].mxu0
    %v202 = vpop.f32.mrb[0].mxu0
    %v203 = vadd.f32 %v109, %v202
    %v204 = vpop.f32.mrb[0].mxu0
    %205 = vdwg.mxu0
    %v206 = vmax.f32 %v200, 0.0
    %v207 = vmax.f32 %v203, 0.0
    %v208 = vpack.c.bf16 %v207, %v206
    %v209 = vld [vmem:[#allocation7] sm:$0xf]
    %v210 = vld [vmem:[#allocation7 + $0x4] sm:$0xf]
    %v211 = vld [vmem:[#allocation7 + $0x8] sm:$0xf]
    %v212 = vld [vmem:[#allocation7 + $0xc] sm:$0xf]
    %v213 = vld [vmem:[#allocation7 + $0x10] sm:$0xf]
    %v214 = vld [vmem:[#allocation7 + $0x14] sm:$0xf]
    %v215 = vld [vmem:[#allocation7 + $0x18] sm:$0xf]
    %v216 = vld [vmem:[#allocation7 + $0x1c] sm:$0xf]
    %v217 = vld [vmem:[#allocation7 + $0x20] sm:$0xf]
    %v218 = vld [vmem:[#allocation7 + $0x24] sm:$0xf]
    %v219 = vld [vmem:[#allocation7 + $0x28] sm:$0xf]
    %v220 = vld [vmem:[#allocation7 + $0x2c] sm:$0xf]
    %v221 = vld [vmem:[#allocation7 + $0x30] sm:$0xf]
    %v222 = vld [vmem:[#allocation7 + $0x34] sm:$0xf]
    %v223 = vld [vmem:[#allocation7 + $0x38] sm:$0xf]
    %v224 = vld [vmem:[#allocation7 + $0x3c] sm:$0xf]
    %v225 = vld [vmem:[%s4] sm:$0x1]
    %v227 = vlaneseq
    %v228 = vshrl.u32 %v227, 7
    %v229 = vsub.s32 0, %v228
    %v230 = vrot.slane %v225, %v229
    %v248 = vunpack.c.l.b16 %v209
    %v249 = vunpack.c.l.b16 %v210
    %v250 = vunpack.c.l.b16 %v211
    %v251 = vunpack.c.l.b16 %v212
    %v252 = vunpack.c.l.b16 %v213
    %v253 = vunpack.c.l.b16 %v214
    %v254 = vunpack.c.l.b16 %v215
    %v255 = vunpack.c.l.b16 %v216
    %v256 = vunpack.c.l.b16 %v217
    %v257 = vunpack.c.l.b16 %v218
    %v258 = vunpack.c.l.b16 %v219
    %v259 = vunpack.c.l.b16 %v220
    %v260 = vunpack.c.l.b16 %v221
    %v261 = vunpack.c.l.b16 %v222
    %v262 = vunpack.c.l.b16 %v223
    %v263 = vunpack.c.l.b16 %v224
    %v264 = vpack.c.b16 %v249, %v248
    %v265 = vpack.c.b16 %v251, %v250
    %v266 = vpack.c.b16 %v253, %v252
    %v267 = vpack.c.b16 %v255, %v254
    %v268 = vpack.c.b16 %v257, %v256
    %v269 = vpack.c.b16 %v259, %v258
    %v270 = vpack.c.b16 %v261, %v260
    %v271 = vpack.c.b16 %v263, %v262
    %280 = vmatprep.subr.bf16.mxu0 0
    %281 = vmatpush1.bf16.msra.mxu0 %v264
    %282 = vmatprep.subr.bf16.mxu0 0
    %283 = vmatpush1.bf16.msra.mxu0 %v265
    %284 = vmatprep.subr.bf16.mxu0 0
    %285 = vmatpush1.bf16.msra.mxu0 %v266
    %286 = vmatprep.subr.bf16.mxu0 0
    %287 = vmatpush1.bf16.msra.mxu0 %v267
    %288 = vmatprep.subr.bf16.mxu0 0
    %289 = vmatpush1.bf16.msra.mxu0 %v268
    %290 = vmatprep.subr.bf16.mxu0 0
    %291 = vmatpush1.bf16.msra.mxu0 %v269
    %292 = vmatprep.subr.bf16.mxu0 0
    %293 = vmatpush1.bf16.msra.mxu0 %v270
    %294 = vmatprep.subr.bf16.mxu0 0
    %295 = vmatpush1.bf16.msra.mxu0 %v271
    %296 = vmatprep.subr.bf16.mxu0 0
    %297 = vmatpush1.bf16.msra.mxu0 0
    %298 = vmatprep.subr.bf16.mxu0 0
    %299 = vmatpush1.bf16.msra.mxu0 0
    %300 = vmatprep.subr.bf16.mxu0 0
    %301 = vmatpush1.bf16.msra.mxu0 0
    %302 = vmatprep.subr.bf16.mxu0 0
    %303 = vmatpush1.bf16.msra.mxu0 0
    %304 = vmatprep.subr.bf16.mxu0 0
    %305 = vmatpush1.bf16.msra.mxu0 0
    %306 = vmatprep.subr.bf16.mxu0 0
    %307 = vmatpush1.bf16.msra.mxu0 0
    %308 = vmatprep.subr.bf16.mxu0 0
    %309 = vmatpush1.bf16.msra.mxu0 0
    %310 = vmatprep.subr.bf16.mxu0 0
    %311 = vmatpush1.bf16.msra.mxu0 0
    %312 = vmatprep.mubr.bf16.mxu0 0
    %313 = vmatmul.mubr.bf16.gmra.mrb[0].mxu0 %v208
    %v314 = vpop.f32.mrb[0].mxu0
    %v315 = vadd.f32 %v230, %v314
    %v316 = vpop.f32.mrb[0].mxu0
    %v317 = vpop.f32.mrb[0].mxu0
    %v318 = vadd.f32 %v230, %v317
    %v319 = vpop.f32.mrb[0].mxu0
    %320 = vdwg.mxu0
    %v321 = vmax.f32 %v315, 0.0
    %v322 = vmax.f32 %v318, 0.0
    %v323 = vpack.c.bf16 %v322, %v321
    %v325 = vunpack.c.l.b16 %v323
    %v326 = vunpack.c.h.b16 %v323
    %v327 = vpack.c.b16 %v325, %v325
    %v328 = vpack.c.b16 %v326, %v326
    %331 = vst [vmem:[#allocation10] sm:$0xf] %v327
    %332 = vst [vmem:[#allocation10 + $0x4] sm:$0xf] %v328
    %v333 = vld [vmem:[#allocation8] sm:$0xff]
    %v334 = vld [vmem:[#allocation8 + $0x8] sm:$0xff]
    %v335 = vld [vmem:[#allocation8 + $0x10] sm:$0xff]
    %v336 = vld [vmem:[#allocation8 + $0x18] sm:$0xff]
    %v337 = vld [vmem:[#allocation8 + $0x20] sm:$0xff]
    %v338 = vld [vmem:[#allocation8 + $0x28] sm:$0xff]
    %v339 = vld [vmem:[#allocation8 + $0x30] sm:$0xff]
    %v340 = vld [vmem:[#allocation8 + $0x38] sm:$0xff]
    %v341 = vld [vmem:[#allocation8 + $0x40] sm:$0xff]
    %v342 = vld [vmem:[#allocation8 + $0x48] sm:$0xff]
    %v343 = vld [vmem:[#allocation8 + $0x50] sm:$0xff]
    %v344 = vld [vmem:[#allocation8 + $0x58] sm:$0xff]
    %v345 = vld [vmem:[#allocation8 + $0x60] sm:$0xff]
    %v346 = vld [vmem:[#allocation8 + $0x68] sm:$0xff]
    %v347 = vld [vmem:[#allocation8 + $0x70] sm:$0xff]
    %v348 = vld [vmem:[#allocation8 + $0x78] sm:$0xff]
    %v349 = vld [vmem:[%s6] sm:$0x3]
    %v351 = vlaneseq
    %v352 = vshrl.u32 %v351, 7
    %v353 = vsub.s32 0, %v352
    %v354 = vrot.slane %v349, %v353
    %v355 = vlaneseq
    %v356 = vshrl.u32 %v355, 7
    %v357 = vsub.s32 1, %v356
    %v358 = vrot.slane %v349, %v357
    %v377 = vunpack.c.l.b16 %v333
    %v378 = vunpack.c.h.b16 %v333
    %v379 = vunpack.c.l.b16 %v334
    %v380 = vunpack.c.h.b16 %v334
    %v381 = vunpack.c.l.b16 %v335
    %v382 = vunpack.c.h.b16 %v335
    %v383 = vunpack.c.l.b16 %v336
    %v384 = vunpack.c.h.b16 %v336
    %v385 = vunpack.c.l.b16 %v337
    %v386 = vunpack.c.h.b16 %v337
    %v387 = vunpack.c.l.b16 %v338
    %v388 = vunpack.c.h.b16 %v338
    %v389 = vunpack.c.l.b16 %v339
    %v390 = vunpack.c.h.b16 %v339
    %v391 = vunpack.c.l.b16 %v340
    %v392 = vunpack.c.h.b16 %v340
    %v393 = vunpack.c.l.b16 %v341
    %v394 = vunpack.c.h.b16 %v341
    %v395 = vunpack.c.l.b16 %v342
    %v396 = vunpack.c.h.b16 %v342
    %v397 = vunpack.c.l.b16 %v343
    %v398 = vunpack.c.h.b16 %v343
    %v399 = vunpack.c.l.b16 %v344
    %v400 = vunpack.c.h.b16 %v344
    %v401 = vunpack.c.l.b16 %v345
    %v402 = vunpack.c.h.b16 %v345
    %v403 = vunpack.c.l.b16 %v346
    %v404 = vunpack.c.h.b16 %v346
    %v405 = vunpack.c.l.b16 %v347
    %v406 = vunpack.c.h.b16 %v347
    %v407 = vunpack.c.l.b16 %v348
    %v408 = vunpack.c.h.b16 %v348
    %v409 = vpack.c.b16 %v379, %v377
    %v410 = vpack.c.b16 %v380, %v378
    %v411 = vpack.c.b16 %v383, %v381
    %v412 = vpack.c.b16 %v384, %v382
    %v413 = vpack.c.b16 %v387, %v385
    %v414 = vpack.c.b16 %v388, %v386
    %v415 = vpack.c.b16 %v391, %v389
    %v416 = vpack.c.b16 %v392, %v390
    %v417 = vpack.c.b16 %v395, %v393
    %v418 = vpack.c.b16 %v396, %v394
    %v419 = vpack.c.b16 %v399, %v397
    %v420 = vpack.c.b16 %v400, %v398
    %v421 = vpack.c.b16 %v403, %v401
    %v422 = vpack.c.b16 %v404, %v402
    %v423 = vpack.c.b16 %v407, %v405
    %v424 = vpack.c.b16 %v408, %v406
    %441 = vmatprep.subr.bf16.mxu0 %v410
    %442 = vmatpush1.bf16.msra.mxu0 %v409
    %443 = vmatprep.subr.bf16.mxu0 %v412
    %444 = vmatpush1.bf16.msra.mxu0 %v411
    %445 = vmatprep.subr.bf16.mxu0 %v414
    %446 = vmatpush1.bf16.msra.mxu0 %v413
    %447 = vmatprep.subr.bf16.mxu0 %v416
    %448 = vmatpush1.bf16.msra.mxu0 %v415
    %449 = vmatprep.subr.bf16.mxu0 %v418
    %450 = vmatpush1.bf16.msra.mxu0 %v417
    %451 = vmatprep.subr.bf16.mxu0 %v420
    %452 = vmatpush1.bf16.msra.mxu0 %v419
    %453 = vmatprep.subr.bf16.mxu0 %v422
    %454 = vmatpush1.bf16.msra.mxu0 %v421
    %455 = vmatprep.subr.bf16.mxu0 %v424
    %456 = vmatpush1.bf16.msra.mxu0 %v423
    %457 = vmatprep.subr.bf16.mxu0 0
    %458 = vmatpush1.bf16.msra.mxu0 0
    %459 = vmatprep.subr.bf16.mxu0 0
    %460 = vmatpush1.bf16.msra.mxu0 0
    %461 = vmatprep.subr.bf16.mxu0 0
    %462 = vmatpush1.bf16.msra.mxu0 0
    %463 = vmatprep.subr.bf16.mxu0 0
    %464 = vmatpush1.bf16.msra.mxu0 0
    %465 = vmatprep.subr.bf16.mxu0 0
    %466 = vmatpush1.bf16.msra.mxu0 0
    %467 = vmatprep.subr.bf16.mxu0 0
    %468 = vmatpush1.bf16.msra.mxu0 0
    %469 = vmatprep.subr.bf16.mxu0 0
    %470 = vmatpush1.bf16.msra.mxu0 0
    %471 = vmatprep.subr.bf16.mxu0 0
    %472 = vmatpush1.bf16.msra.mxu0 0
    %473 = vmatprep.mubr.bf16.mxu0 0
    %474 = vmatmul.mubr.bf16.gmra.mrb[0].mxu0 %v323
    %v475 = vpop.f32.mrb[0].mxu0
    %v476 = vadd.f32 %v354, %v475
    %v477 = vpop.f32.mrb[0].mxu0
    %v478 = vadd.f32 %v358, %v477
    %v479 = vpop.f32.mrb[0].mxu0
    %v480 = vadd.f32 %v354, %v479
    %v481 = vpop.f32.mrb[0].mxu0
    %v482 = vadd.f32 %v358, %v481
    %483 = vdwg.mxu0
    %v484 = vmax.f32 %v476, %v478
    %485 = vmax.xlane.f32.xlu0 %v484
    %v486 = vpop.xlane.xlu0 %485
    %v487 = vmax.f32 %v480, %v482
    %488 = vmax.xlane.f32.xlu0 %v487
    %v489 = vpop.xlane.xlu0 %488
    %v490 = vsub.f32 %v476, %v486
    %v491 = vsub.f32 %v478, %v486
    %v492 = vsub.f32 %v480, %v489
    %v493 = vsub.f32 %v482, %v489
    %v494 = vmul.f32 %v490, 1.442695
    %v495 = vpow.pop %v494
    %v496 = vmul.f32 %v491, 1.442695
    %v497 = vpow.pop %v496
    %v498 = vmul.f32 %v492, 1.442695
    %v499 = vpow.pop %v498
    %v500 = vmul.f32 %v493, 1.442695
    %v501 = vpow.pop %v500
    %v502 = vadd.f32 %v495, %v497
    %503 = vadd.xlane.f32.xlu0 %v502
    %v504 = vpop.xlane.xlu0 %503
    %v505 = vadd.f32 %v499, %v501
    %506 = vadd.xlane.f32.xlu0 %v505
    %v507 = vpop.xlane.xlu0 %506
    %v508 = vrcp.pop %v504
    %v509 = vrcp.pop %v507
    %v510 = vmul.f32 %v495, %v508
    %v511 = vmul.f32 %v497, %v508
    %v512 = vmul.f32 %v499, %v509
    %v513 = vmul.f32 %v501, %v509
    %514 = vst [vmem:[#allocation11] sm:$0xff] %v510
    %515 = vst [vmem:[#allocation11 + $0x8] sm:$0xff] %v511
    %516 = vst [vmem:[#allocation11 + $0x10] sm:$0xff] %v512
    %517 = vst [vmem:[#allocation11 + $0x18] sm:$0xff] %v513
    // Predicated region
    $region46: #{tpu_custom_call.1} parent=1 // pred_check
      _
    $region47: #{tpu_custom_call.1} parent=1 // pred_check_branch
      %519 = sbr.rel (0) target = $region49
    $region48: #{tpu_custom_call.1} parent=1 // pred_region
      %s521 = ssub.s32 128, 128
      %522 = vsyncadd [#allocation4], %s521
      %s523 = sshll.u32 [#allocation10], 4
      %s524 = int_to_ptr.vmem [resolvable:$true] %s523
      %529 = dma.vmem_to_hbm [thread:$0]  %s524, 128, %s7, [#allocation4], 64, 64, 4
    $region49: #{tpu_custom_call.1} parent=1 // pred_fallthru
      _
    // Predicated region
    $region50: #{tpu_custom_call.1} parent=1 // pred_check
      _
    $region51: #{tpu_custom_call.1} parent=1 // pred_check_branch
      %531 = sbr.rel (0) target = $region53
    $region52: #{tpu_custom_call.1} parent=1 // pred_region
      %s533 = ssub.s32 512, 512
      %534 = vsyncadd [#allocation12], %s533
      %s535 = sshll.u32 [#allocation11], 4
      %s536 = int_to_ptr.vmem [resolvable:$true] %s535
      %541 = dma.vmem_to_hbm [thread:$0]  %s536, 512, %s8, [#allocation12], 256, 256, 16
    $region53: #{tpu_custom_call.1} parent=1 // pred_fallthru
      _
    // Predicated region
    $region54: #{tpu_custom_call.1} parent=1 // pred_check
      _
    $region55: #{tpu_custom_call.1} parent=1 // pred_check_branch
      %543 = sbr.rel (0) target = $region57
    $region56: #{tpu_custom_call.1} parent=1 // pred_region
      %544 = dma.done [#allocation4], 128
    $region57: #{tpu_custom_call.1} parent=1 // pred_fallthru
      _
    // Predicated region
    $region58: #{tpu_custom_call.1} parent=1 // pred_check
      _
    $region59: #{tpu_custom_call.1} parent=1 // pred_check_branch
      %546 = sbr.rel (0) target = $region61
    $region60: #{tpu_custom_call.1} parent=1 // pred_region
      %547 = dma.done [#allocation12], 512
    $region61: #{tpu_custom_call.1} parent=1 // pred_fallthru
      _
    %548 = vsyncpa [#allocation3], 1
    %549 = vsyncpa [#allocation6], 1
    %550 = vsyncpa [#allocation9], 1
    %551 = vsyncpa [#allocation4], 1
    %552 = vsyncpa [#allocation12], 1

</llo_original>
